<compile_context>
chip_gen: v6e
topology: v6e:2x2x1
jax: 0.10.0
libtpu: 0.0.40
codegen_flags: <defaults>
</compile_context>

<pallas_src>
import functools
import math
import numpy as np
import jax
import jax.numpy as jnp
from jax.experimental import pallas as pl
from jax.experimental.pallas import tpu as pltpu

PI = float(np.pi)
_MiB = 1024 * 1024


# ----------------------------- Pallas kernels -----------------------------

def _e2p_kernel(d_ref, cx_ref, ry_ref, o_ref, *, hc, n_chunks):
    """Separable bilinear equirect->perspective resample for one lane-dense
    tile of output pixels of BOTH views, fused over latitude chunks.

      d_ref : (2, Hh, W)  bf16  per-view latitude window of the equirect depth
                                (resident: constant index_map, pre-cast bf16)
      cx_ref: (W,  tn)    bf16  longitude taps (shared by both views)
      ry_ref: (2, Hh, tn) bf16  latitude taps, |sin(lat)| planar scale folded in
      o_ref : (2,  tn)    f32   planar perspective depth (row 0 zenith, row 1 nadir)
    """
    cx = cx_ref[...]                                        # (W, tn) bf16
    for v in range(2):                                      # static view loop
        acc = jnp.zeros((1, o_ref.shape[-1]), jnp.float32)
        for c in range(n_chunks):                           # static chunk loop
            r0 = c * hc
            d_blk = d_ref[v, r0:r0 + hc, :]                 # (hc, W) bf16
            g = jnp.dot(d_blk, cx,
                        preferred_element_type=jnp.float32)  # (hc, tn) f32 (MXU)
            w = ry_ref[v, r0:r0 + hc, :].astype(jnp.float32)
            acc = acc + jnp.sum(g * w, axis=0, keepdims=True)
        o_ref[v:v + 1, :] = acc                             # lane-dense store


def dist_mask_bbox_kernel(up_ref, down_ref, cdist_ref, fdist_ref, bbox_ref):
    """Fused epilogue: global maxima of the zenith/nadir planar-depth maps,
    ceiling-mask threshold, and the axis-aligned bbox of that mask.
    Scalar results go out through SMEM."""
    up = up_ref[...]
    down = down_ref[...]
    c = jnp.max(up)          # c_dist = max ceiling-view planar depth
    f = jnp.max(down)        # f_dist = max floor-view planar depth
    cdist_ref[0, 0] = c
    fdist_ref[0, 0] = f

    # Non-empty whenever c > 0 (the argmax pixel always passes the threshold);
    # if the ceiling map is identically zero the bbox degenerates, matching the
    # original module's "no contour found" failure mode.
    mask = up > c * jnp.float32(0.95)
    rows = jax.lax.broadcasted_iota(jnp.float32, up.shape, 0)
    cols = jax.lax.broadcasted_iota(jnp.float32, up.shape, 1)
    big = jnp.float32(up.shape[0])
    bbox_ref[0] = jnp.min(jnp.where(mask, cols, big))     # xmin
    bbox_ref[1] = jnp.min(jnp.where(mask, rows, big))     # ymin
    bbox_ref[2] = jnp.max(jnp.where(mask, cols, -1.0))    # xmax
    bbox_ref[3] = jnp.max(jnp.where(mask, rows, -1.0))    # ymax


# ----------------------------- kernel wrappers -----------------------------

def _round_up(x, m):
    return ((x + m - 1) // m) * m


def _vmem_capacity_bytes():
    try:
        cap = getattr(pltpu.get_tpu_info(), "vmem_capacity_bytes", None)
        if cap:
            return int(cap)
    except Exception:
        pass
    return 64 * _MiB        # conservative fallback (v7x per-TC size)


def _ws_bytes(tn, Hh, W, hc):
    """Estimated per-step VMEM working set of the e2p kernel."""
    cx = 2 * W * tn * 2               # longitude taps, double buffered
    ry = 2 * 2 * Hh * tn * 2          # latitude taps, double buffered
    d = 2 * 2 * Hh * W * 2            # resident depth views (conservative x2)
    out = 2 * 2 * tn * 4
    tmp = hc * tn * 4 + 4 * tn * 4    # per-chunk f32 matmul result + accumulators
    return cx + ry + d + out + tmp


def _pick_tile(N, Hh, W, hc, budget):
    """Largest lane-aligned output tile whose working set fits the VMEM budget."""
    for cand in (8192, 4096, 2048, 1024, 512, 256, 128):
        if cand <= N and N % cand == 0 and _ws_bytes(cand, Hh, W, hc) <= budget:
            return cand
    return N    # tiny fp: single full-extent block


def e2p_project(depth_views, cxT, ryT, hc):
    """depth_views: (2, Hh, W) bf16 per-view latitude windows of the equirect
    euclidean depth.  cxT: (W, fp^2) bf16 shared longitude taps;
    ryT: (2, Hh, fp^2) bf16 per-view latitude taps with |sin(lat)| folded in.
    Returns (2, fp^2) f32 planar perspective depths (row 0 zenith, row 1 nadir)."""
    two, Hh, W = depth_views.shape
    Wc, N = cxT.shape
    assert two == 2 and Wc == W and ryT.shape == (2, Hh, N) and Hh % hc == 0
    n_chunks = Hh // hc

    cap = _vmem_capacity_bytes()
    budget = max(20 * _MiB, min(cap // 2, 48 * _MiB))
    tn = _pick_tile(N, Hh, W, hc, budget)
    vmem_limit = int(min(cap - 8 * _MiB,
                         max(2 * _ws_bytes(tn, Hh, W, hc), 32 * _MiB)))

    kern = functools.partial(_e2p_kernel, hc=hc, n_chunks=n_chunks)
    return pl.pallas_call(
        kern,
        out_shape=jax.ShapeDtypeStruct((2, N), jnp.float32),
        grid=(N // tn,),
        in_specs=[
            pl.BlockSpec((2, Hh, W), lambda t: (0, 0, 0)),   # depth: resident
            pl.BlockSpec((W, tn), lambda t: (0, t)),         # longitude taps (shared)
            pl.BlockSpec((2, Hh, tn), lambda t: (0, 0, t)),  # latitude taps * |sin|
        ],
        out_specs=pl.BlockSpec((2, tn), lambda t: (0, t)),
        compiler_params=pltpu.CompilerParams(
            dimension_semantics=("parallel",),   # v7x: shard tiles on 2 TCs
            vmem_limit_bytes=vmem_limit),
    )(depth_views, cxT, ryT)


def dist_mask_bbox(d_up, d_down):
    """Fused c_dist/f_dist + ceiling-mask threshold + bbox reduction."""
    return pl.pallas_call(
        dist_mask_bbox_kernel,
        out_shape=(jax.ShapeDtypeStruct((1, 1), jnp.float32),
                   jax.ShapeDtypeStruct((1, 1), jnp.float32),
                   jax.ShapeDtypeStruct((4,), jnp.float32)),
        out_specs=(pl.BlockSpec(memory_space=pltpu.SMEM),
                   pl.BlockSpec(memory_space=pltpu.SMEM),
                   pl.BlockSpec(memory_space=pltpu.SMEM)),
    )(d_up, d_down)


# ----------------------------- parameter setup -----------------------------

def _choose_latitude_window(max_count, H):
    """Latitude-window height Hh (multiple of 8, covers the widest view's taps)
    and the chunk size Hc used for the fused latitude reduction."""
    Hh = min(_round_up(max_count, 8), H)
    Hh128 = _round_up(max_count, 128)
    if Hh128 <= H and (Hh128 - max_count) * 4 <= max_count:
        Hh = Hh128            # pay <=25% zero-row pad to enable 128-row MXU chunks
    for hc in (128, 256, 64, 32):
        if Hh % hc == 0:
            return Hh, hc
    return Hh, Hh             # single chunk


def build_e2p_tables(H, W, fp, fov_deg):
    """Separable bilinear interpolation factors for the zenith (up) and nadir
    (down) perspective views, restricted to the latitude rows each view touches.

    Returns:
      CxT    : (W, fp*fp) f32    longitude taps (2 nonzeros / column), SHARED by
                                 both views (lon is independent of the view sign)
      RyT    : (2, Hh, fp*fp) f32 per-view latitude taps (2 nonzeros / column),
                                 with the euclidean->planar |sin(lat)| scale folded
      starts : (2,) ints         first equirect row of each view's window
      Hh, Hc : window height / fused-reduction chunk size
      fl     : focal length
    The dense bilinear weight of output pixel n of view v at source (y, x) is
    exactly RyT[v, y - starts[v], n] * CxT[x, n].
    """
    t = math.tan(math.radians(fov_deg) / 2.0)
    c = (np.arange(fp, dtype=np.float64) + 0.5) / fp * 2.0 - 1.0
    X, Y = np.meshgrid(c * t, c * t)          # X: output col dir, Y: output row dir
    r = np.sqrt(X ** 2 + Y ** 2) + 1e-9
    N = fp * fp
    cols = np.arange(N)

    # Longitude taps (shared by both views).
    lon = np.arctan2(X, -Y).reshape(-1)
    coorx = (lon / (2 * PI) + 0.5) * W - 0.5          # inverse of np_coorx2u
    x0 = np.floor(coorx)
    wx = coorx - x0
    CxT = np.zeros((W, N), np.float32)
    for dx in (0, 1):
        xi = (x0.astype(np.int64) + dx) % W                       # wrap longitude
        np.add.at(CxT, (xi, cols), (wx if dx else 1.0 - wx).astype(np.float32))

    # Per-view latitude taps with the euclidean->planar |sin(lat)| scale folded in.
    v_row = -((np.arange(H, dtype=np.float64) + 0.5) / H - 0.5) * PI
    s_row = np.abs(np.sin(v_row))
    ry_full, ranges = [], []
    for z_sign in (+1.0, -1.0):               # +1: zenith / up, -1: nadir / down
        lat = z_sign * np.arctan2(1.0, r).reshape(-1)
        coory = (-lat / PI + 0.5) * H - 0.5            # inverse of np_coory2v
        y0 = np.floor(coory)
        wy = coory - y0
        Rv = np.zeros((H, N), np.float32)
        lo, hi = H, -1
        for dy in (0, 1):
            yi = np.clip(y0.astype(np.int64) + dy, 0, H - 1)      # clamp latitude
            w = (wy if dy else 1.0 - wy) * s_row[yi]              # fold |sin(lat)|
            np.add.at(Rv, (yi, cols), w.astype(np.float32))
            lo, hi = min(lo, int(yi.min())), max(hi, int(yi.max()))
        ry_full.append(Rv)
        ranges.append((lo, hi))

    max_count = max(hi - lo + 1 for lo, hi in ranges)
    Hh, Hc = _choose_latitude_window(max_count, H)
    starts = tuple(min(lo, H - Hh) for lo, hi in ranges)
    RyT = np.stack([ry_full[v][starts[v]:starts[v] + Hh] for v in range(2)], axis=0)

    fl = (fp / 2.0) / t
    return CxT, RyT, starts, Hh, Hc, fl


def xy2coor_jnp(xy, z, coorW, coorH, eps=1e-3):
    x = xy[:, 0] + eps
    y = xy[:, 1] + eps
    u = jnp.arctan2(x, -y)
    v = jnp.arctan(z / jnp.sqrt(x ** 2 + y ** 2))
    coorx = (u / (2 * PI) + 0.5) * coorW - 0.5
    coory = (-v / PI + 0.5) * coorH - 0.5
    return jnp.stack([coorx, coory], axis=-1)


# ----------------------------- D2L module -----------------------------

class D2L:
    def __init__(self, H=512, W=1024, fp_size=512, fp_fov=165.0):
        self.H, self.W = H, W
        self.img_size = [W, H]
        self.fp_size = fp_size
        self.fp_fov = fp_fov
        # deterministic "parameters": separable E2P interp tables (bf16) + focal
        CxT, RyT, starts, Hh, Hc, fl = build_e2p_tables(H, W, fp_size, fp_fov)
        self.cxT = jnp.asarray(CxT, dtype=jnp.bfloat16)   # (W, fp^2), shared
        self.ryT = jnp.asarray(RyT, dtype=jnp.bfloat16)   # (2, Hh, fp^2)
        self.row_starts = starts
        self.Hh, self.Hc = Hh, Hc
        self.fl = float(fl)

    # ---- helpers -----------------------------------------------------------
    def _contour_pts2equi_layout(self, c_pts, W, H, c_dist, f_dist, tr):
        # atl_pts2xy: floorplan pixel coords -> metric XY
        metric_scale = c_dist / math.tan(math.pi * (180.0 - self.fp_fov) / 360.0) * 2.0
        pts = (c_pts - self.fp_size / 2.0) / self.fp_size
        xy = pts * metric_scale
        if tr is None:
            tr = jnp.zeros((1, 3), jnp.float32)
        xy = xy.at[:, 0].add(-tr[0, 0])
        xy = xy.at[:, 1].add(tr[0, 1])
        off = tr[0, 2]
        c_dist = c_dist - off
        f_dist = f_dist + off
        c_cor = xy2coor_jnp(xy, c_dist, W, H)
        f_cor = xy2coor_jnp(xy, -f_dist, W, H)
        # interleave ceiling/floor corners -> (2N, 2)
        return jnp.stack([c_cor, f_cor], axis=1).reshape(-1, 2)

    # ---- forward -----------------------------------------------------------
    def forward(self, depth, tr=None):
        """depth: (1, H, W) float32 equirect euclidean depth."""
        H, W, fp = self.H, self.W, self.fp_size
        d = depth[0]

        # Hoisted f32->bf16 cast + per-view latitude-window slice (one cheap XLA
        # op); the kernel never re-casts the grid-invariant depth block.
        s_up, s_dn = self.row_starts
        depth_views = jnp.stack([d[s_up:s_up + self.Hh],
                                 d[s_dn:s_dn + self.Hh]]).astype(jnp.bfloat16)

        # E2P resample (|sin(lat)| planar scale folded into ryT) — Pallas hot path.
        proj = e2p_project(depth_views, self.cxT, self.ryT, self.Hc)   # (2, fp^2)
        d_up = proj[0].reshape(fp, fp)
        d_down = proj[1].reshape(fp, fp)

        # Fused epilogue: c_dist/f_dist maxima + cmask threshold + bbox contour.
        c_dist, f_dist, bbox = dist_mask_bbox(d_up, d_down)
        c_dist = c_dist[0, 0]
        f_dist = f_dist[0, 0]

        # TODO(synk): cv2.findContours/approxPolyDP has no Pallas/JAX equivalent;
        # the axis-aligned bounding box of the ceiling mask is used as the
        # 4-point contour instead.
        xmin, ymin, xmax, ymax = bbox[0], bbox[1], bbox[2], bbox[3]
        c_pts = jnp.stack([jnp.stack([xmin, ymin]),
                           jnp.stack([xmax, ymin]),
                           jnp.stack([xmax, ymax]),
                           jnp.stack([xmin, ymax])], axis=0)   # (4, 2) in (x, y)

        # TODO(synk): MW_post_processing / cor_2_1d are external and not
        # translatable; the non-post-processed equi_pts path is used.
        equi_pts = self._contour_pts2equi_layout(c_pts, W, H, c_dist, f_dist, tr)
        return equi_pts, c_dist, f_dist


# ----------------------------- main -----------------------------

if __name__ == "__main__":
    H, W, FP, FOV = 16, 32, 16, 165.0       # small shapes (equirect 2:1)
    model = D2L(H=H, W=W, fp_size=FP, fp_fov=FOV)

    key = jax.random.PRNGKey(0)
    depth = jax.random.uniform(key, (1, H, W), jnp.float32, minval=1.0, maxval=3.0)

    equi_pts, c_dist, f_dist = model.forward(depth)
    jax.block_until_ready((equi_pts, c_dist, f_dist))

    assert equi_pts.shape == (8, 2)
    assert jnp.isfinite(equi_pts).all()
    assert jnp.isfinite(c_dist) and jnp.isfinite(f_dist)
    print("KERNEL_OK")
</pallas_src>

<mosaic_0001>
module attributes {stable_mosaic.version = 11 : i64} {
  func.func @_e2p_kernel(%arg0: i32, %arg1: memref<2x8x32xbf16, #tpu.memory_space<vmem>>, %arg2: memref<32x256xbf16, #tpu.memory_space<vmem>>, %arg3: memref<2x8x256xbf16, #tpu.memory_space<vmem>>, %arg4: memref<2x256xf32, #tpu.memory_space<vmem>>) attributes {dimension_semantics = [#tpu.dimension_semantics<parallel>], iteration_bounds = array<i64: 1>, scalar_prefetch = 0 : i64, scratch_operands = 0 : i64, tpu.core_type = #tpu.core_type<tc>, window_params = [{pipeline_mode = #tpu.pipeline_mode<synchronous>, transform_indices = @transform_0, window_bounds = array<i64: 2, 8, 32>}, {transform_indices = @transform_1, window_bounds = array<i64: 32, 256>}, {transform_indices = @transform_2, window_bounds = array<i64: 2, 8, 256>}, {transform_indices = @transform_3, window_bounds = array<i64: 2, 256>}]} {
    %c0 = arith.constant 0 : index
    %c0_0 = arith.constant 0 : index
    %0 = vector.load %arg2[%c0, %c0_0] : memref<32x256xbf16, #tpu.memory_space<vmem>>, vector<32x256xbf16>
    %cst = arith.constant 0.000000e+00 : f32
    %1 = vector.broadcast %cst : f32 to vector<1x256xf32>
    %c0_1 = arith.constant 0 : index
    %c0_2 = arith.constant 0 : index
    %c0_3 = arith.constant 0 : index
    %2 = vector.load %arg1[%c0_1, %c0_2, %c0_3] : memref<2x8x32xbf16, #tpu.memory_space<vmem>>, vector<1x8x32xbf16>
    %3 = vector.shape_cast %2 : vector<1x8x32xbf16> to vector<8x32xbf16>
    %cst_4 = arith.constant dense<0.000000e+00> : vector<8x256xf32>
    %4 = tpu.matmul %3, %0, %cst_4 {dimension_numbers = #tpu.dot_dimension_numbers<[1], [0], [0], [1], [0, 0, 1, 1], [], []>} : vector<8x32xbf16>, vector<32x256xbf16>, vector<8x256xf32> -> vector<8x256xf32>
    %c0_5 = arith.constant 0 : index
    %c0_6 = arith.constant 0 : index
    %c0_7 = arith.constant 0 : index
    %5 = vector.load %arg3[%c0_5, %c0_6, %c0_7] : memref<2x8x256xbf16, #tpu.memory_space<vmem>>, vector<1x8x256xbf16>
    %6 = vector.shape_cast %5 : vector<1x8x256xbf16> to vector<8x256xbf16>
    %7 = arith.extf %6 : vector<8x256xbf16> to vector<8x256xf32>
    %8 = arith.mulf %4, %7 : vector<8x256xf32>
    %cst_8 = arith.constant dense<0.000000e+00> : vector<256xf32>
    %9 = vector.multi_reduction <add>, %8, %cst_8 [0] : vector<8x256xf32> to vector<256xf32>
    %10 = vector.shape_cast %9 : vector<256xf32> to vector<1x256xf32>
    %11 = arith.addf %1, %10 : vector<1x256xf32>
    %c0_9 = arith.constant 0 : index
    %c0_10 = arith.constant 0 : index
    %12 = vector.load %arg4[%c0_9, %c0_10] : memref<2x256xf32, #tpu.memory_space<vmem>>, vector<1x256xf32>
    tpu.vector_store %arg4[%c0_9, %c0_10], %11 {strides = array<i32>} : memref<2x256xf32, #tpu.memory_space<vmem>>, vector<1x256xf32>,
    %cst_11 = arith.constant 0.000000e+00 : f32
    %13 = vector.broadcast %cst_11 : f32 to vector<1x256xf32>
    %c1 = arith.constant 1 : index
    %c0_12 = arith.constant 0 : index
    %c0_13 = arith.constant 0 : index
    %14 = vector.load %arg1[%c1, %c0_12, %c0_13] : memref<2x8x32xbf16, #tpu.memory_space<vmem>>, vector<1x8x32xbf16>
    %15 = vector.shape_cast %14 : vector<1x8x32xbf16> to vector<8x32xbf16>
    %cst_14 = arith.constant dense<0.000000e+00> : vector<8x256xf32>
    %16 = tpu.matmul %15, %0, %cst_14 {dimension_numbers = #tpu.dot_dimension_numbers<[1], [0], [0], [1], [0, 0, 1, 1], [], []>} : vector<8x32xbf16>, vector<32x256xbf16>, vector<8x256xf32> -> vector<8x256xf32>
    %c1_15 = arith.constant 1 : index
    %c0_16 = arith.constant 0 : index
    %c0_17 = arith.constant 0 : index
    %17 = vector.load %arg3[%c1_15, %c0_16, %c0_17] : memref<2x8x256xbf16, #tpu.memory_space<vmem>>, vector<1x8x256xbf16>
    %18 = vector.shape_cast %17 : vector<1x8x256xbf16> to vector<8x256xbf16>
    %19 = arith.extf %18 : vector<8x256xbf16> to vector<8x256xf32>
    %20 = arith.mulf %16, %19 : vector<8x256xf32>
    %cst_18 = arith.constant dense<0.000000e+00> : vector<256xf32>
    %21 = vector.multi_reduction <add>, %20, %cst_18 [0] : vector<8x256xf32> to vector<256xf32>
    %22 = vector.shape_cast %21 : vector<256xf32> to vector<1x256xf32>
    %23 = arith.addf %13, %22 : vector<1x256xf32>
    %c1_19 = arith.constant 1 : index
    %c0_20 = arith.constant 0 : index
    %24 = vector.load %arg4[%c1_19, %c0_20] : memref<2x256xf32, #tpu.memory_space<vmem>>, vector<1x256xf32>
    tpu.vector_store %arg4[%c1_19, %c0_20], %23 {strides = array<i32>} : memref<2x256xf32, #tpu.memory_space<vmem>>, vector<1x256xf32>,
    return
  }
  func.func @transform_0(%arg0: i32) -> (i32, i32, i32) {
    %c0_i32 = arith.constant 0 : i32
    %c0_i32_0 = arith.constant 0 : i32
    %c0_i32_1 = arith.constant 0 : i32
    %c0_i32_2 = arith.constant 0 : i32
    return %c0_i32, %c0_i32_0, %c0_i32_1 : i32, i32, i32
  }
  func.func @transform_1(%arg0: i32) -> (i32, i32) {
    %c0_i32 = arith.constant 0 : i32
    %c0_i32_0 = arith.constant 0 : i32
    return %c0_i32, %arg0 : i32, i32
  }
  func.func @transform_2(%arg0: i32) -> (i32, i32, i32) {
    %c0_i32 = arith.constant 0 : i32
    %c0_i32_0 = arith.constant 0 : i32
    %c0_i32_1 = arith.constant 0 : i32
    return %c0_i32, %c0_i32_0, %arg0 : i32, i32, i32
  }
  func.func @transform_3(%arg0: i32) -> (i32, i32) {
    %c0_i32 = arith.constant 0 : i32
    %c0_i32_0 = arith.constant 0 : i32
    return %c0_i32, %arg0 : i32, i32
  }
}

</mosaic_0001>

<llo_original>
// kernel: tpu_custom_call.1
$region0: #{tpu_custom_call.1}
  #allocation0 [shape = 'u32[]', space=smem, size = 0x4, offset = 0x4, fixed_abs, tag = 'smem constant byte address 0x4 - core index']
  #allocation1 [shape = 'u32[144,128]{1,0:T(1,128)}', space=vmem, size = 0x12000, scoped, tag = 'internal scratch']
  %s0 = inlined_call_operand.hbm [shape: bf16[2,8,32], index: 0, kind: input, shape index: {}]
  %s1 = inlined_call_operand.hbm [shape: bf16[32,256], index: 1, kind: input, shape index: {}]
  %s2 = inlined_call_operand.hbm [shape: bf16[2,8,256], index: 2, kind: input, shape index: {}]
  %s3 = inlined_call_operand.hbm [shape: f32[2,256], index: 3, kind: output, shape index: {}]
  %s4 = sld [smem:[#allocation0]]
  $region34: #{tpu_custom_call.1} parent=0
    _
  %s6 = ssub.s32 1, %s4
  %s7 = scalar_select 0, %s6, %s4
  $region1: #{tpu_custom_call.1} parent=0
    #allocation2 [shape = 'u8[4096]{0}', space=vmem, size = 0x1000, scoped, tag = 'input window, operand 0, single buffered']
    #allocation3 [shape = 's32[1]{0}', space=sflag, size = 0x4, scoped, tag = 'scoped memory for tpu_custom_call.1']
    #allocation4 [shape = 's32[1]{0}', space=sflag, size = 0x4, scoped, tag = 'scoped memory for tpu_custom_call.1']
    #allocation5 [shape = 'u8[16384]{0}', space=vmem, size = 0x4000, scoped, tag = 'input window, operand 1, single buffered']
    #allocation6 [shape = 's32[1]{0}', space=sflag, size = 0x4, scoped, tag = 'scoped memory for tpu_custom_call.1']
    #allocation7 [shape = 'u8[8192]{0}', space=vmem, size = 0x2000, scoped, tag = 'input window, operand 2, single buffered']
    #allocation8 [shape = 'u8[2048]{0}', space=vmem, size = 0x800, scoped, tag = 'output window, operand 0, single buffered']
    %8 = vsyncpa [#allocation3], 0
    %9 = vsyncpa [#allocation6], 0
    %10 = vsyncpa [#allocation4], 0
    // Predicated region
    $region2: #{tpu_custom_call.1} parent=1 // pred_check
      _
    $region3: #{tpu_custom_call.1} parent=1 // pred_check_branch
      %12 = sbr.rel (0) target = $region5
    $region4: #{tpu_custom_call.1} parent=1 // pred_region
      %s14 = ssub.s32 128, 128
      %15 = vsyncadd [#allocation3], %s14
      %s16 = sshll.u32 [#allocation2], 4
      %s17 = int_to_ptr.vmem [resolvable:$true] %s16
      %22 = dma.hbm_to_vmem [thread:$0]  %s0, 128, %s17, [#allocation3], 64, 64, 4
    $region5: #{tpu_custom_call.1} parent=1 // pred_fallthru
      _
    // Predicated region
    $region6: #{tpu_custom_call.1} parent=1 // pred_check
      _
    $region7: #{tpu_custom_call.1} parent=1 // pred_check_branch
      %24 = sbr.rel (0) target = $region9
    $region8: #{tpu_custom_call.1} parent=1 // pred_region
      %s26 = ssub.s32 512, 512
      %27 = vsyncadd [#allocation6], %s26
      %s28 = sshll.u32 [#allocation5], 4
      %s29 = int_to_ptr.vmem [resolvable:$true] %s28
      %34 = dma.hbm_to_vmem [thread:$0]  %s1, 512, %s29, [#allocation6], 128, 128, 8
    $region9: #{tpu_custom_call.1} parent=1 // pred_fallthru
      _
    // Predicated region
    $region10: #{tpu_custom_call.1} parent=1 // pred_check
      _
    $region11: #{tpu_custom_call.1} parent=1 // pred_check_branch
      %36 = sbr.rel (0) target = $region13
    $region12: #{tpu_custom_call.1} parent=1 // pred_region
      %s38 = ssub.s32 256, 256
      %39 = vsyncadd [#allocation6], %s38
      %s40 = sshll.u32 [#allocation7], 4
      %s41 = int_to_ptr.vmem [resolvable:$true] %s40
      %46 = dma.hbm_to_vmem [thread:$0]  %s2, 256, %s41, [#allocation6], 128, 128, 8
    $region13: #{tpu_custom_call.1} parent=1 // pred_fallthru
      _
    // Predicated region
    $region14: #{tpu_custom_call.1} parent=1 // pred_check
      _
    $region15: #{tpu_custom_call.1} parent=1 // pred_check_branch
      %48 = sbr.rel (0) target = $region17
    $region16: #{tpu_custom_call.1} parent=1 // pred_region
      %49 = dma.done [#allocation3], 128
    $region17: #{tpu_custom_call.1} parent=1 // pred_fallthru
      _
    // Predicated region
    $region18: #{tpu_custom_call.1} parent=1 // pred_check
      _
    $region19: #{tpu_custom_call.1} parent=1 // pred_check_branch
      %51 = sbr.rel (0) target = $region21
    $region20: #{tpu_custom_call.1} parent=1 // pred_region
      %52 = dma.done [#allocation6], 512
    $region21: #{tpu_custom_call.1} parent=1 // pred_fallthru
      _
    // Predicated region
    $region22: #{tpu_custom_call.1} parent=1 // pred_check
      _
    $region23: #{tpu_custom_call.1} parent=1 // pred_check_branch
      %54 = sbr.rel (0) target = $region25
    $region24: #{tpu_custom_call.1} parent=1 // pred_region
      %55 = dma.done [#allocation6], 256
    $region25: #{tpu_custom_call.1} parent=1 // pred_fallthru
      _
    %v57 = vld [vmem:[#allocation5] sm:$0xff]
    %v58 = vld [vmem:[#allocation5 + $0x8] sm:$0xff]
    %v59 = vld [vmem:[#allocation5 + $0x10] sm:$0xff]
    %v60 = vld [vmem:[#allocation5 + $0x18] sm:$0xff]
    %v61 = vld [vmem:[#allocation2] sm:$0xf]
    %v66 = vunpack.c.l.b16 %v57
    %v67 = vunpack.c.h.b16 %v57
    %v68 = vunpack.c.l.b16 %v58
    %v69 = vunpack.c.h.b16 %v58
    %v70 = vunpack.c.l.b16 %v59
    %v71 = vunpack.c.h.b16 %v59
    %v72 = vunpack.c.l.b16 %v60
    %v73 = vunpack.c.h.b16 %v60
    %v74 = vpack.c.b16 %v68, %v66
    %v75 = vpack.c.b16 %v69, %v67
    %v76 = vpack.c.b16 %v72, %v70
    %v77 = vpack.c.b16 %v73, %v71
    %vm82 = vcmask 261120
    %v84 = vsel %vm82, %v61, 0
    %86 = vmatprep.subr.bf16.mxu0 0
    %87 = vmatpush1.bf16.msra.mxu0 0
    %88 = vmatprep.subr.bf16.mxu0 0
    %89 = vmatpush1.bf16.msra.mxu0 0
    %90 = vmatprep.subr.bf16.mxu0 0
    %91 = vmatpush1.bf16.msra.mxu0 0
    %92 = vmatprep.subr.bf16.mxu0 0
    %93 = vmatpush1.bf16.msra.mxu0 0
    %94 = vmatprep.subr.bf16.mxu0 0
    %95 = vmatpush1.bf16.msra.mxu0 0
    %96 = vmatprep.subr.bf16.mxu0 0
    %97 = vmatpush1.bf16.msra.mxu0 0
    %98 = vmatprep.subr.bf16.mxu0 %v77
    %99 = vmatpush1.bf16.msra.mxu0 %v76
    %100 = vmatprep.subr.bf16.mxu0 %v75
    %101 = vmatpush1.bf16.msra.mxu0 %v74
    %102 = vmatprep.subr.bf16.mxu0 0
    %103 = vmatpush2.bf16.msra.mxu0 0
    %104 = vmatprep.subr.bf16.mxu0 0
    %105 = vmatpush2.bf16.msra.mxu0 0
    %106 = vmatprep.subr.bf16.mxu0 0
    %107 = vmatpush2.bf16.msra.mxu0 0
    %108 = vmatprep.subr.bf16.mxu0 0
    %109 = vmatpush2.bf16.msra.mxu0 0
    %110 = vmatprep.subr.bf16.mxu0 0
    %111 = vmatpush2.bf16.msra.mxu0 0
    %112 = vmatprep.subr.bf16.mxu0 0
    %113 = vmatpush2.bf16.msra.mxu0 0
    %114 = vmatprep.subr.bf16.mxu0 0
    %115 = vmatpush2.bf16.msra.mxu0 0
    %116 = vmatprep.subr.bf16.mxu0 0
    %117 = vmatpush2.bf16.msra.mxu0 0
    %118 = vmatprep.mubr.bf16.mxu0 0
    %119 = vmatmul.mubr.bf16.gmra.mxu0 %v84
    %v120 = vpop.f32.mrf.mxu0
    %v121 = vadd.f32 0.0, %v120
    %v122 = vpop.f32.mrf.mxu0
    %v123 = vadd.f32 0.0, %v122
    %v124 = vpop.f32.mrf.mxu0
    %v125 = vpop.f32.mrf.mxu0
    %126 = vdwg.mxu0
    %v127 = vld [vmem:[#allocation7] sm:$0xff]
    %v128 = vunpack.c.l.bf16 %v127
    %v129 = vunpack.c.h.bf16 %v127
    %v130 = vmul.f32 %v121, %v128
    %v131 = vmul.f32 %v123, %v129
    %v132 = vrot.slane %v130, 4
    %v133 = vadd.f32 %v130, %v132
    %v134 = vrot.slane %v133, 2
    %v135 = vadd.f32 %v133, %v134
    %v136 = vrot.slane %v135, 1
    %v137 = vadd.f32 %v135, %v136
    %v138 = vrot.slane %v131, 4
    %v139 = vadd.f32 %v131, %v138
    %v140 = vrot.slane %v139, 2
    %v141 = vadd.f32 %v139, %v140
    %v142 = vrot.slane %v141, 1
    %v143 = vadd.f32 %v141, %v142
    %v144 = vadd.f32 %v137, 0.0
    %v145 = vadd.f32 %v143, 0.0
    %v148 = vcombine.low %v144, %v145
    %v150 = vunpack.c.l.s4 1966171168
    %v151 = vunpack.c.0.s8 %v150
    %v152 = vlaneseq
    %v153 = vshrl.u32 %v152, 7
    %v154 = vsub.s32 %v151, %v153
    %v155 = vrot.slane %v148, %v154
    %v157 = vunpack.c.l.s4 1966171168
    %v158 = vunpack.c.0.s8 %v157
    %v159 = vlaneseq
    %v160 = vshrl.u32 %v159, 7
    %v161 = vsub.s32 %v158, %v160
    %v162 = vrot.slane %v155, %v161
    %v164 = vlaneseq
    %vm165 = vcmp.ge.s32.totalorder %v164, 0
    %vm166 = vcmp.lt.s32.totalorder %v164, 256
    %vm167 = vmand %vm165, %vm166
    %168 = vst.msk [vmem:[#allocation8] ss:$2 sm:$0x3] %vm167, %v162
    %s169 = scalar_lea.vmem [#allocation2], 4
    %v170 = vld [vmem:[%s169] sm:$0xf]
    %v172 = vsel %vm82, %v170, 0
    %174 = vmatprep.subr.bf16.mxu0 0
    %175 = vmatpush1.bf16.msra.mxu0 0
    %176 = vmatprep.subr.bf16.mxu0 0
    %177 = vmatpush1.bf16.msra.mxu0 0
    %178 = vmatprep.subr.bf16.mxu0 0
    %179 = vmatpush1.bf16.msra.mxu0 0
    %180 = vmatprep.subr.bf16.mxu0 0
    %181 = vmatpush1.bf16.msra.mxu0 0
    %182 = vmatprep.subr.bf16.mxu0 0
    %183 = vmatpush1.bf16.msra.mxu0 0
    %184 = vmatprep.subr.bf16.mxu0 0
    %185 = vmatpush1.bf16.msra.mxu0 0
    %186 = vmatprep.subr.bf16.mxu0 %v77
    %187 = vmatpush1.bf16.msra.mxu0 %v76
    %188 = vmatprep.subr.bf16.mxu0 %v75
    %189 = vmatpush1.bf16.msra.mxu0 %v74
    %190 = vmatprep.subr.bf16.mxu0 0
    %191 = vmatpush2.bf16.msra.mxu0 0
    %192 = vmatprep.subr.bf16.mxu0 0
    %193 = vmatpush2.bf16.msra.mxu0 0
    %194 = vmatprep.subr.bf16.mxu0 0
    %195 = vmatpush2.bf16.msra.mxu0 0
    %196 = vmatprep.subr.bf16.mxu0 0
    %197 = vmatpush2.bf16.msra.mxu0 0
    %198 = vmatprep.subr.bf16.mxu0 0
    %199 = vmatpush2.bf16.msra.mxu0 0
    %200 = vmatprep.subr.bf16.mxu0 0
    %201 = vmatpush2.bf16.msra.mxu0 0
    %202 = vmatprep.subr.bf16.mxu0 0
    %203 = vmatpush2.bf16.msra.mxu0 0
    %204 = vmatprep.subr.bf16.mxu0 0
    %205 = vmatpush2.bf16.msra.mxu0 0
    %206 = vmatprep.mubr.bf16.mxu0 0
    %207 = vmatmul.mubr.bf16.gmra.mxu0 %v172
    %v208 = vpop.f32.mrf.mxu0
    %v209 = vadd.f32 0.0, %v208
    %v210 = vpop.f32.mrf.mxu0
    %v211 = vadd.f32 0.0, %v210
    %v212 = vpop.f32.mrf.mxu0
    %v213 = vpop.f32.mrf.mxu0
    %214 = vdwg.mxu0
    %s215 = scalar_lea.vmem [#allocation7], 8
    %v216 = vld [vmem:[%s215] sm:$0xff]
    %v217 = vunpack.c.l.bf16 %v216
    %v218 = vunpack.c.h.bf16 %v216
    %v219 = vmul.f32 %v209, %v217
    %v220 = vmul.f32 %v211, %v218
    %v221 = vrot.slane %v219, 4
    %v222 = vadd.f32 %v219, %v221
    %v223 = vrot.slane %v222, 2
    %v224 = vadd.f32 %v222, %v223
    %v225 = vrot.slane %v224, 1
    %v226 = vadd.f32 %v224, %v225
    %v227 = vrot.slane %v220, 4
    %v228 = vadd.f32 %v220, %v227
    %v229 = vrot.slane %v228, 2
    %v230 = vadd.f32 %v228, %v229
    %v231 = vrot.slane %v230, 1
    %v232 = vadd.f32 %v230, %v231
    %v233 = vadd.f32 %v226, 0.0
    %v234 = vadd.f32 %v232, 0.0
    %v237 = vcombine.low %v233, %v234
    %v239 = vunpack.c.l.s4 1966171168
    %v240 = vunpack.c.0.s8 %v239
    %v241 = vlaneseq
    %v242 = vshrl.u32 %v241, 7
    %v243 = vsub.s32 %v240, %v242
    %v244 = vrot.slane %v237, %v243
    %v246 = vunpack.c.l.s4 1966171168
    %v247 = vunpack.c.0.s8 %v246
    %v248 = vlaneseq
    %v249 = vshrl.u32 %v248, 7
    %v250 = vsub.s32 %v247, %v249
    %v251 = vrot.slane %v244, %v250
    %s253 = scalar_lea.vmem [#allocation8], 1
    %254 = vst.msk [vmem:[%s253] ss:$2 sm:$0x3] %vm167, %v251
    // Predicated region
    $region26: #{tpu_custom_call.1} parent=1 // pred_check
      _
    $region27: #{tpu_custom_call.1} parent=1 // pred_check_branch
      %256 = sbr.rel (0) target = $region29
    $region28: #{tpu_custom_call.1} parent=1 // pred_region
      %s258 = ssub.s32 64, 64
      %259 = vsyncadd [#allocation4], %s258
      %s261 = sshll.u32 [#allocation8], 4
      %s262 = int_to_ptr.vmem [resolvable:$true] %s261
      %264 = dma.vmem_to_hbm [thread:$0]  %s262, 64, %s3, [#allocation4]
    $region29: #{tpu_custom_call.1} parent=1 // pred_fallthru
      _
    // Predicated region
    $region30: #{tpu_custom_call.1} parent=1 // pred_check
      _
    $region31: #{tpu_custom_call.1} parent=1 // pred_check_branch
      %266 = sbr.rel (0) target = $region33
    $region32: #{tpu_custom_call.1} parent=1 // pred_region
      %267 = dma.done [#allocation4], 64
    $region33: #{tpu_custom_call.1} parent=1 // pred_fallthru
      _
    %268 = vsyncpa [#allocation3], 1
    %269 = vsyncpa [#allocation6], 1
    %270 = vsyncpa [#allocation4], 1

</llo_original>
